<compile_context>
chip_gen: v7x
topology: tpu7x:2x2x1
jax: 0.10.0
libtpu: 0.0.40
codegen_flags: <defaults>
</compile_context>

<pallas_src>
import jax
import jax.numpy as jnp
from jax.experimental import pallas as pl
from jax.experimental.pallas import tpu as pltpu

IN_DIM = 100
OUT_DIM = 11


def rel_matrix_kernel(x_ref, w_ref, b_ref, o_ref):
    # x_ref: (tm, 100) VMEM tile (native input dtype)
    # w_ref: (100, 11) VMEM (resident across the grid; constant block index)
    # b_ref: (1, 11)   f32 VMEM (bias with 0.01*loss1 already folded in)
    # o_ref: (tm, 11)  VMEM tile
    y = jnp.dot(x_ref[...], w_ref[...], preferred_element_type=jnp.float32)
    o_ref[...] = (y + b_ref[...]).astype(o_ref.dtype)


def _round_up(x, m):
    return (x + m - 1) // m * m


def _choose_tm(batch, max_tm=8192, align=16):
    """Large row tile, aligned to 16 rows (bf16 sublane packing).

    - Whole batch in one tile whenever it fits in max_tm (partial block is masked).
    - Otherwise split into an even number of steps (< 8) so v7x's two TensorCores
      get a balanced parallel axis; cap per-tile rows at max_tm.
    """
    bp = _round_up(max(batch, align), align)
    if bp <= max_tm:
        return bp
    n = (bp + max_tm - 1) // max_tm
    if n % 2 == 1 and n < 8:
        n += 1
    return _round_up((bp + n - 1) // n, align)


def relationship_matrix_forward(x, W, b, *, tm=None):
    B = x.shape[0]
    out_dtype = x.dtype

    # ---- parameter-only math (11x11) in plain JAX glue ----
    # trace(W @ inv(omiga) @ W^T) == trace(sqrtm(W^T W))^2  (no explicit inverse)
    Wf = W.astype(jnp.float32)
    WTW = Wf.T @ Wf                                   # (11, 11), symmetric PSD
    evals = jnp.linalg.eigvalsh(WTW)
    tr_sqrt = jnp.sum(jnp.sqrt(jnp.maximum(evals, 0.0)))
    loss1 = tr_sqrt * tr_sqrt
    # Fold the scalar offset into the bias: out = x @ W + (b + 0.01*loss1)
    b_eff = (b.astype(jnp.float32) + 0.01 * loss1)    # (1, 11), f32

    # ---- tiling: no padding, partial tail block handled by Pallas ----
    if tm is None:
        tm = _choose_tm(B)
    n_steps = pl.cdiv(B, tm)

    x_isz = jnp.dtype(x.dtype).itemsize
    o_isz = jnp.dtype(out_dtype).itemsize
    w_isz = jnp.dtype(W.dtype).itemsize

    out = pl.pallas_call(
        rel_matrix_kernel,
        out_shape=jax.ShapeDtypeStruct((B, OUT_DIM), out_dtype),
        grid=(n_steps,),
        in_specs=[
            pl.BlockSpec((tm, IN_DIM), lambda i: (i, 0)),        # x tile (streams)
            pl.BlockSpec((IN_DIM, OUT_DIM), lambda i: (0, 0)),   # W (VMEM-resident)
            pl.BlockSpec((1, OUT_DIM), lambda i: (0, 0)),        # b_eff (VMEM-resident)
        ],
        out_specs=pl.BlockSpec((tm, OUT_DIM), lambda i: (i, 0)),
        compiler_params=pltpu.CompilerParams(
            dimension_semantics=("parallel",),
            vmem_limit_bytes=32 * 1024 * 1024,   # fits tm=8192 double-buffered on v5e
        ),
        cost_estimate=pl.CostEstimate(
            flops=2 * B * IN_DIM * OUT_DIM,
            transcendentals=0,
            bytes_accessed=B * IN_DIM * x_isz
                           + B * OUT_DIM * o_isz
                           + IN_DIM * OUT_DIM * w_isz
                           + OUT_DIM * 4,
        ),
    )(x, W, b_eff)

    return out


def _reference(x, W, b):
    # Original module's math path (explicit sqrtm + inverse) for validation.
    WTW = W.T @ W
    evals, evecs = jnp.linalg.eigh(WTW)
    WTW_sqrt = (evecs * jnp.sqrt(jnp.maximum(evals, 0.0))) @ evecs.T
    omiga = WTW_sqrt / jnp.trace(WTW_sqrt)
    loss1 = jnp.trace(W @ jnp.linalg.inv(omiga) @ W.T)
    return x @ W + b + 0.01 * loss1


if __name__ == "__main__":
    key = jax.random.PRNGKey(0)
    k_x, k_w, k_b = jax.random.split(key, 3)

    # B=100 is not a multiple of 16: exercises the unpadded partial-tail-block path.
    B = 100
    x = jax.random.normal(k_x, (B, IN_DIM), dtype=jnp.float32)

    # Deterministic parameter init (matches module __init__ shapes):
    #   W: xavier_normal_ -> std = sqrt(2 / (fan_in + fan_out)) = sqrt(2/111)
    #   b: standard normal
    xavier_std = jnp.sqrt(2.0 / (IN_DIM + OUT_DIM))
    W = jax.random.normal(k_w, (IN_DIM, OUT_DIM), dtype=jnp.float32) * xavier_std
    b = jax.random.normal(k_b, (1, OUT_DIM), dtype=jnp.float32)

    ref = _reference(x, W, b)

    # Default tiling: single partial tile (tm=112 > B=100), output writeback masked.
    out = jax.block_until_ready(relationship_matrix_forward(x, W, b))
    assert out.shape == (B, OUT_DIM)
    assert jnp.allclose(out, ref, atol=1e-3, rtol=1e-3), "mismatch vs reference (default tm)"

    # Multi-step ragged grid: tm=48 -> 3 grid steps with a partial tail block.
    out2 = jax.block_until_ready(relationship_matrix_forward(x, W, b, tm=48))
    assert jnp.allclose(out2, ref, atol=1e-3, rtol=1e-3), "mismatch vs reference (tm=48)"

    print("KERNEL_OK")
</pallas_src>

<mosaic_0001>
module attributes {stable_mosaic.version = 11 : i64} {
  func.func @rel_matrix_kernel(%arg0: i32, %arg1: memref<112x100xf32, #tpu.memory_space<vmem>>, %arg2: memref<100x11xf32, #tpu.memory_space<vmem>>, %arg3: memref<1x11xf32, #tpu.memory_space<vmem>>, %arg4: memref<112x11xf32, #tpu.memory_space<vmem>>) attributes {dimension_semantics = [#tpu.dimension_semantics<parallel>], iteration_bounds = array<i64: 1>, scalar_prefetch = 0 : i64, scratch_operands = 0 : i64, tpu.core_type = #tpu.core_type<tc>, window_params = [{transform_indices = @transform_0, window_bounds = array<i64: 112, 100>}, {pipeline_mode = #tpu.pipeline_mode<synchronous>, transform_indices = @transform_1, window_bounds = array<i64: 100, 11>}, {pipeline_mode = #tpu.pipeline_mode<synchronous>, transform_indices = @transform_2, window_bounds = array<i64: 1, 11>}, {transform_indices = @transform_3, window_bounds = array<i64: 112, 11>}]} {
    %c0 = arith.constant 0 : index
    %c0_0 = arith.constant 0 : index
    %0 = vector.load %arg1[%c0, %c0_0] : memref<112x100xf32, #tpu.memory_space<vmem>>, vector<112x100xf32>
    %c0_1 = arith.constant 0 : index
    %c0_2 = arith.constant 0 : index
    %1 = vector.load %arg2[%c0_1, %c0_2] : memref<100x11xf32, #tpu.memory_space<vmem>>, vector<100x11xf32>
    %cst = arith.constant dense<0.000000e+00> : vector<112x11xf32>
    %2 = tpu.matmul %0, %1, %cst {dimension_numbers = #tpu.dot_dimension_numbers<[1], [0], [0], [1], [0, 0, 1, 1], [], []>} : vector<112x100xf32>, vector<100x11xf32>, vector<112x11xf32> -> vector<112x11xf32>
    %c0_3 = arith.constant 0 : index
    %c0_4 = arith.constant 0 : index
    %3 = vector.load %arg3[%c0_3, %c0_4] : memref<1x11xf32, #tpu.memory_space<vmem>>, vector<1x11xf32>
    %4 = vector.broadcast %3 : vector<1x11xf32> to vector<112x11xf32>
    %5 = arith.addf %2, %4 : vector<112x11xf32>
    %c0_5 = arith.constant 0 : index
    %c0_6 = arith.constant 0 : index
    %6 = vector.load %arg4[%c0_5, %c0_6] : memref<112x11xf32, #tpu.memory_space<vmem>>, vector<112x11xf32>
    tpu.vector_store %arg4[%c0_5, %c0_6], %5 {strides = array<i32>} : memref<112x11xf32, #tpu.memory_space<vmem>>, vector<112x11xf32>,
    return
  }
  func.func @transform_0(%arg0: i32) -> (i32, i32) {
    %c0_i32 = arith.constant 0 : i32
    %c0_i32_0 = arith.constant 0 : i32
    return %arg0, %c0_i32 : i32, i32
  }
  func.func @transform_1(%arg0: i32) -> (i32, i32) {
    %c0_i32 = arith.constant 0 : i32
    %c0_i32_0 = arith.constant 0 : i32
    %c0_i32_1 = arith.constant 0 : i32
    return %c0_i32, %c0_i32_0 : i32, i32
  }
  func.func @transform_2(%arg0: i32) -> (i32, i32) {
    %c0_i32 = arith.constant 0 : i32
    %c0_i32_0 = arith.constant 0 : i32
    %c0_i32_1 = arith.constant 0 : i32
    return %c0_i32, %c0_i32_0 : i32, i32
  }
  func.func @transform_3(%arg0: i32) -> (i32, i32) {
    %c0_i32 = arith.constant 0 : i32
    %c0_i32_0 = arith.constant 0 : i32
    return %arg0, %c0_i32 : i32, i32
  }
}

</mosaic_0001>

<llo_original>
// kernel: tpu_custom_call.1
$region0: #{tpu_custom_call.1}
  #allocation0 [shape = 'u32[]', space=smem, size = 0x4, offset = 0x4, fixed_abs, tag = 'smem constant byte address 0x4 - core index']
  #allocation1 [shape = 'u32[144,128]{1,0:T(1,128)}', space=vmem, size = 0x12000, scoped, tag = 'internal scratch']
  %s0 = inlined_call_operand.vmem [shape: f32[100,100], index: 0, kind: input, shape index: {}]
  %s1 = inlined_call_operand.vmem [shape: f32[100,11], index: 1, kind: input, shape index: {}]
  %s2 = inlined_call_operand.vmem [shape: f32[1,11], index: 2, kind: input, shape index: {}]
  %s3 = inlined_call_operand.vmem [shape: f32[100,11], index: 3, kind: output, shape index: {}]
  %s4 = sld [smem:[#allocation0]]
  $region56: #{tpu_custom_call.1} parent=0
    _
  %s6 = ssub.s32 1, %s4
  %s7 = scalar_select 0, %s6, %s4
  $region1: #{tpu_custom_call.1} parent=0
    #allocation2 [shape = 'u8[57344]{0}', space=vmem, size = 0xe000, scoped, tag = 'output window, operand 0, single buffered']
    // Predicated region
    $region2: #{tpu_custom_call.1} parent=1 // pred_check
      _
    $region3: #{tpu_custom_call.1} parent=1 // pred_check_branch
      %9 = sbr.rel (0) target = $region5
    $region4: #{tpu_custom_call.1} parent=1 // pred_region
      _
    $region5: #{tpu_custom_call.1} parent=1 // pred_fallthru
      _
    // Predicated region
    $region6: #{tpu_custom_call.1} parent=1 // pred_check
      _
    $region7: #{tpu_custom_call.1} parent=1 // pred_check_branch
      %11 = sbr.rel (0) target = $region9
    $region8: #{tpu_custom_call.1} parent=1 // pred_region
      _
    $region9: #{tpu_custom_call.1} parent=1 // pred_fallthru
      _
    // Predicated region
    $region10: #{tpu_custom_call.1} parent=1 // pred_check
      _
    $region11: #{tpu_custom_call.1} parent=1 // pred_check_branch
      %13 = sbr.rel (0) target = $region13
    $region12: #{tpu_custom_call.1} parent=1 // pred_region
      _
    $region13: #{tpu_custom_call.1} parent=1 // pred_fallthru
      _
    %v14 = vld [vmem:[%s0] sm:$0xff]
    %v15 = vld [vmem:[%s0 + $0x8] sm:$0xff]
    %v16 = vld [vmem:[%s0 + $0x10] sm:$0xff]
    %v17 = vld [vmem:[%s0 + $0x18] sm:$0xff]
    %v18 = vld [vmem:[%s0 + $0x20] sm:$0xff]
    %v19 = vld [vmem:[%s0 + $0x28] sm:$0xff]
    %v20 = vld [vmem:[%s0 + $0x30] sm:$0xff]
    %v21 = vld [vmem:[%s0 + $0x38] sm:$0xff]
    %v22 = vld [vmem:[%s0 + $0x40] sm:$0xff]
    %v23 = vld [vmem:[%s0 + $0x48] sm:$0xff]
    %v24 = vld [vmem:[%s0 + $0x50] sm:$0xff]
    %v25 = vld [vmem:[%s0 + $0x58] sm:$0xff]
    %v26 = vld [vmem:[%s0 + $0x60] sm:$0xff]
    %v27 = vld [vmem:[%s0 + $0x68] sm:$0xff]
    %v28 = vld [vmem:[%s1] sm:$0xff]
    %v29 = vld [vmem:[%s1 + $0x8] sm:$0xff]
    %v30 = vld [vmem:[%s1 + $0x10] sm:$0xff]
    %v31 = vld [vmem:[%s1 + $0x18] sm:$0xff]
    %v32 = vld [vmem:[%s1 + $0x20] sm:$0xff]
    %v33 = vld [vmem:[%s1 + $0x28] sm:$0xff]
    %v34 = vld [vmem:[%s1 + $0x30] sm:$0xff]
    %v35 = vld [vmem:[%s1 + $0x38] sm:$0xff]
    %v36 = vld [vmem:[%s1 + $0x40] sm:$0xff]
    %v37 = vld [vmem:[%s1 + $0x48] sm:$0xff]
    %v38 = vld [vmem:[%s1 + $0x50] sm:$0xff]
    %v39 = vld [vmem:[%s1 + $0x58] sm:$0xff]
    %v40 = vld [vmem:[%s1 + $0x60] sm:$0xf]
    %v41 = vld [vmem:[%s2] sm:$0x1]
    %v43 = vlaneseq
    %v44 = vshrl.u32 %v43, 7
    %v45 = vsub.s32 0, %v44
    %v46 = vrot.slane %v41, %v45
    %vm48 = vcmask 818176
    %v50 = vsel %vm48, %v14, 0
    %v53 = vsel %vm48, %v15, 0
    %v56 = vsel %vm48, %v16, 0
    %v59 = vsel %vm48, %v17, 0
    %v62 = vsel %vm48, %v18, 0
    %v65 = vsel %vm48, %v19, 0
    %v68 = vsel %vm48, %v20, 0
    %v71 = vsel %vm48, %v21, 0
    %v74 = vsel %vm48, %v22, 0
    %v77 = vsel %vm48, %v23, 0
    %v80 = vsel %vm48, %v24, 0
    %v83 = vsel %vm48, %v25, 0
    %v86 = vsel %vm48, %v26, 0
    %v89 = vsel %vm48, %v27, 0
    %vm91 = vcmask 1043456
    %v93 = vsel %vm91, %v40, 0
    %95 = vmatprep.subr.mxu0 0.0
    %96 = vmatpush1.msra.mxu0 %v28
    %97 = vmatprep.subr.mxu0 0.0
    %98 = vmatpush1.msra.mxu0 %v29
    %99 = vmatprep.subr.mxu0 0.0
    %100 = vmatpush1.msra.mxu0 %v30
    %101 = vmatprep.subr.mxu0 0.0
    %102 = vmatpush1.msra.mxu0 %v31
    %103 = vmatprep.subr.mxu0 0.0
    %104 = vmatpush1.msra.mxu0 %v32
    %105 = vmatprep.subr.mxu0 0.0
    %106 = vmatpush1.msra.mxu0 %v33
    %107 = vmatprep.subr.mxu0 0.0
    %108 = vmatpush1.msra.mxu0 %v34
    %109 = vmatprep.subr.mxu0 0.0
    %110 = vmatpush1.msra.mxu0 %v35
    %111 = vmatprep.subr.mxu0 0.0
    %112 = vmatpush1.msra.mxu0 %v36
    %113 = vmatprep.subr.mxu0 0.0
    %114 = vmatpush1.msra.mxu0 %v37
    %115 = vmatprep.subr.mxu0 0.0
    %116 = vmatpush1.msra.mxu0 %v38
    %117 = vmatprep.subr.mxu0 0.0
    %118 = vmatpush1.msra.mxu0 %v39
    %119 = vmatprep.subr.mxu0 0.0
    %120 = vmatpush1.msra.mxu0 %v93
    %121 = vmatprep.subr.mxu0 0.0
    %122 = vmatpush1.msra.mxu0 0.0
    %123 = vmatprep.subr.mxu0 0.0
    %124 = vmatpush1.msra.mxu0 0.0
    %125 = vmatprep.subr.mxu0 0.0
    %126 = vmatpush1.msra.mxu0 0.0
    %127 = vmatprep.subr.mxu0 0.0
    %128 = vmatpush1.msra.mxu0 0.0
    %129 = vmatprep.subr.mxu0 0.0
    %130 = vmatpush1.msra.mxu0 0.0
    %131 = vmatprep.subr.mxu0 0.0
    %132 = vmatpush1.msra.mxu0 0.0
    %133 = vmatprep.subr.mxu0 0.0
    %134 = vmatpush1.msra.mxu0 0.0
    %135 = vmatprep.subr.mxu0 0.0
    %136 = vmatpush1.msra.mxu0 0.0
    %137 = vmatprep.subr.mxu0 0.0
    %138 = vmatpush1.msra.mxu0 0.0
    %139 = vmatprep.subr.mxu0 0.0
    %140 = vmatpush1.msra.mxu0 0.0
    %141 = vmatprep.subr.mxu0 0.0
    %142 = vmatpush1.msra.mxu0 0.0
    %143 = vmatprep.subr.mxu0 0.0
    %144 = vmatpush1.msra.mxu0 0.0
    %145 = vmatprep.subr.mxu0 0.0
    %146 = vmatpush1.msra.mxu0 0.0
    %147 = vmatprep.subr.mxu0 0.0
    %148 = vmatpush1.msra.mxu0 0.0
    %149 = vmatprep.subr.mxu0 0.0
    %150 = vmatpush1.msra.mxu0 0.0
    %151 = vmatprep.subr.mxu0 0.0
    %152 = vmatpush1.msra.mxu0 0.0
    %153 = vmatprep.subr.mxu0 0.0
    %154 = vmatpush1.msra.mxu0 0.0
    %155 = vmatprep.subr.mxu0 0.0
    %156 = vmatpush1.msra.mxu0 0.0
    %157 = vmatprep.subr.mxu0 0.0
    %158 = vmatpush1.msra.mxu0 0.0
    %159 = vmatprep.mubr.f32.mxu0 0.0
    %160 = vmatmul.mubr.f32.gmra.mrb[0].mxu0 %v50
    %v161 = vpop.f32.mrb[0].mxu0
    %v162 = vadd.f32 %v46, %v161
    %v163 = vpop.f32.mrb[0].mxu0
    %164 = vmatprep.mubr.f32.mxu0 0.0
    %165 = vmatmul.mubr.f32.gmra.mrb[0].mxu0 %v53
    %v166 = vpop.f32.mrb[0].mxu0
    %v167 = vadd.f32 %v46, %v166
    %v168 = vpop.f32.mrb[0].mxu0
    %169 = vmatprep.mubr.f32.mxu0 0.0
    %170 = vmatmul.mubr.f32.gmra.mrb[0].mxu0 %v56
    %v171 = vpop.f32.mrb[0].mxu0
    %v172 = vadd.f32 %v46, %v171
    %v173 = vpop.f32.mrb[0].mxu0
    %174 = vmatprep.mubr.f32.mxu0 0.0
    %175 = vmatmul.mubr.f32.gmra.mrb[0].mxu0 %v59
    %v176 = vpop.f32.mrb[0].mxu0
    %v177 = vadd.f32 %v46, %v176
    %v178 = vpop.f32.mrb[0].mxu0
    %179 = vmatprep.mubr.f32.mxu0 0.0
    %180 = vmatmul.mubr.f32.gmra.mrb[0].mxu0 %v62
    %v181 = vpop.f32.mrb[0].mxu0
    %v182 = vadd.f32 %v46, %v181
    %v183 = vpop.f32.mrb[0].mxu0
    %184 = vmatprep.mubr.f32.mxu0 0.0
    %185 = vmatmul.mubr.f32.gmra.mrb[0].mxu0 %v65
    %v186 = vpop.f32.mrb[0].mxu0
    %v187 = vadd.f32 %v46, %v186
    %v188 = vpop.f32.mrb[0].mxu0
    %189 = vmatprep.mubr.f32.mxu0 0.0
    %190 = vmatmul.mubr.f32.gmra.mrb[0].mxu0 %v68
    %v191 = vpop.f32.mrb[0].mxu0
    %v192 = vadd.f32 %v46, %v191
    %v193 = vpop.f32.mrb[0].mxu0
    %194 = vmatprep.mubr.f32.mxu0 0.0
    %195 = vmatmul.mubr.f32.gmra.mrb[0].mxu0 %v71
    %v196 = vpop.f32.mrb[0].mxu0
    %v197 = vadd.f32 %v46, %v196
    %v198 = vpop.f32.mrb[0].mxu0
    %199 = vmatprep.mubr.f32.mxu0 0.0
    %200 = vmatmul.mubr.f32.gmra.mrb[0].mxu0 %v74
    %v201 = vpop.f32.mrb[0].mxu0
    %v202 = vadd.f32 %v46, %v201
    %v203 = vpop.f32.mrb[0].mxu0
    %204 = vmatprep.mubr.f32.mxu0 0.0
    %205 = vmatmul.mubr.f32.gmra.mrb[0].mxu0 %v77
    %v206 = vpop.f32.mrb[0].mxu0
    %v207 = vadd.f32 %v46, %v206
    %v208 = vpop.f32.mrb[0].mxu0
    %209 = vmatprep.mubr.f32.mxu0 0.0
    %210 = vmatmul.mubr.f32.gmra.mrb[0].mxu0 %v80
    %v211 = vpop.f32.mrb[0].mxu0
    %v212 = vadd.f32 %v46, %v211
    %v213 = vpop.f32.mrb[0].mxu0
    %214 = vmatprep.mubr.f32.mxu0 0.0
    %215 = vmatmul.mubr.f32.gmra.mrb[0].mxu0 %v83
    %v216 = vpop.f32.mrb[0].mxu0
    %v217 = vadd.f32 %v46, %v216
    %v218 = vpop.f32.mrb[0].mxu0
    %219 = vmatprep.mubr.f32.mxu0 0.0
    %220 = vmatmul.mubr.f32.gmra.mrb[0].mxu0 %v86
    %v221 = vpop.f32.mrb[0].mxu0
    %v222 = vadd.f32 %v46, %v221
    %v223 = vpop.f32.mrb[0].mxu0
    %224 = vmatprep.mubr.f32.mxu0 0.0
    %225 = vmatmul.mubr.f32.gmra.mrb[0].mxu0 %v89
    %v226 = vpop.f32.mrb[0].mxu0
    %v227 = vadd.f32 %v46, %v226
    %v228 = vpop.f32.mrb[0].mxu0
    %229 = vdwg.mxu0
    %vm230 = vcmask 89088
    %231 = vst.msk [vmem:[#allocation2] sm:$0xff] %vm230, %v162
    %232 = vst.msk [vmem:[#allocation2 + $0x8] sm:$0xff] %vm230, %v167
    %233 = vst.msk [vmem:[#allocation2 + $0x10] sm:$0xff] %vm230, %v172
    %234 = vst.msk [vmem:[#allocation2 + $0x18] sm:$0xff] %vm230, %v177
    %235 = vst.msk [vmem:[#allocation2 + $0x20] sm:$0xff] %vm230, %v182
    %236 = vst.msk [vmem:[#allocation2 + $0x28] sm:$0xff] %vm230, %v187
    %237 = vst.msk [vmem:[#allocation2 + $0x30] sm:$0xff] %vm230, %v192
    %238 = vst.msk [vmem:[#allocation2 + $0x38] sm:$0xff] %vm230, %v197
    %239 = vst.msk [vmem:[#allocation2 + $0x40] sm:$0xff] %vm230, %v202
    %240 = vst.msk [vmem:[#allocation2 + $0x48] sm:$0xff] %vm230, %v207
    %241 = vst.msk [vmem:[#allocation2 + $0x50] sm:$0xff] %vm230, %v212
    %242 = vst.msk [vmem:[#allocation2 + $0x58] sm:$0xff] %vm230, %v217
    %243 = vst.msk [vmem:[#allocation2 + $0x60] sm:$0xff] %vm230, %v222
    %244 = vst.msk [vmem:[#allocation2 + $0x68] sm:$0xff] %vm230, %v227
    // Predicated region
    $region14: #{tpu_custom_call.1} parent=1 // pred_check
      _
    $region15: #{tpu_custom_call.1} parent=1 // pred_check_branch
      %246 = sbr.rel (0) target = $region17
    $region16: #{tpu_custom_call.1} parent=1 // pred_region
      // Predicated region
      $region18: #{tpu_custom_call.1} parent=16 // pred_check
        _
      $region19: #{tpu_custom_call.1} parent=16 // pred_check_branch
        %248 = sbr.rel (0) target = $region21
      $region20: #{tpu_custom_call.1} parent=16 // pred_region
        // Predicated region
        $region22: #{tpu_custom_call.1} parent=20 // pred_check
          _
        $region23: #{tpu_custom_call.1} parent=20 // pred_check_branch
          %250 = sbr.rel (0) target = $region25
        $region24: #{tpu_custom_call.1} parent=20 // pred_region
          // Predicated region
          $region37: #{tpu_custom_call.1} parent=24 // pred_check
            _
          $region38: #{tpu_custom_call.1} parent=24 // pred_check_branch
            %289 = sbr.rel (0) target = $region40
          $region39: #{tpu_custom_call.1} parent=24 // pred_region
            loop: start=0, step=1, limit=1
            $region41: #{tpu_custom_call.1} parent=39 // loop_pre_header
              _
            $region42: #{tpu_custom_call.1} parent=39 // loop_header
              %s291 = sphi 0, %s295
              %p292 = scmp.ge.s32.totalorder %s291, 1
              %s296 = sphi [#allocation2], [#allocation2]
              %s297 = sphi %s3, %s3
            $region43: #{tpu_custom_call.1} parent=39 // loop_header_branch
              %294 = sbr.rel (%p292) target = $region47
            $region44: #{tpu_custom_call.1} parent=39 // loop_body
              %v298 = vld [vmem:[%s296] sm:$0xff]
              %299 = vst [vmem:[%s297] sm:$0xff] %v298
              %v300 = vld [vmem:[%s296 + $0x8] sm:$0xff]
              %301 = vst [vmem:[%s297 + $0x8] sm:$0xff] %v300
              %v302 = vld [vmem:[%s296 + $0x10] sm:$0xff]
              %303 = vst [vmem:[%s297 + $0x10] sm:$0xff] %v302
              %v304 = vld [vmem:[%s296 + $0x18] sm:$0xff]
              %305 = vst [vmem:[%s297 + $0x18] sm:$0xff] %v304
              %v306 = vld [vmem:[%s296 + $0x20] sm:$0xff]
              %307 = vst [vmem:[%s297 + $0x20] sm:$0xff] %v306
              %v308 = vld [vmem:[%s296 + $0x28] sm:$0xff]
              %309 = vst [vmem:[%s297 + $0x28] sm:$0xff] %v308
              %v310 = vld [vmem:[%s296 + $0x30] sm:$0xff]
              %311 = vst [vmem:[%s297 + $0x30] sm:$0xff] %v310
              %v312 = vld [vmem:[%s296 + $0x38] sm:$0xff]
              %313 = vst [vmem:[%s297 + $0x38] sm:$0xff] %v312
              %v314 = vld [vmem:[%s296 + $0x40] sm:$0xff]
              %315 = vst [vmem:[%s297 + $0x40] sm:$0xff] %v314
              %v316 = vld [vmem:[%s296 + $0x48] sm:$0xff]
              %317 = vst [vmem:[%s297 + $0x48] sm:$0xff] %v316
              %v318 = vld [vmem:[%s296 + $0x50] sm:$0xff]
              %319 = vst [vmem:[%s297 + $0x50] sm:$0xff] %v318
              %v320 = vld [vmem:[%s296 + $0x58] sm:$0xff]
              %321 = vst [vmem:[%s297 + $0x58] sm:$0xff] %v320
              %v322 = vld [vmem:[%s296 + $0x60] sm:$0xff]
              %323 = vst [vmem:[%s297 + $0x60] sm:$0xff] %v322
            $region45: #{tpu_custom_call.1} parent=39 // loop_footer
              %s295 = sadd.s32 1, %s291
            $region46: #{tpu_custom_call.1} parent=39 // loop_footer_branch
              %290 = sbr.rel target = $region42
            $region47: #{tpu_custom_call.1} parent=39 // loop_exit
              _
          $region40: #{tpu_custom_call.1} parent=24 // pred_fallthru
            _
          // Predicated region
          $region48: #{tpu_custom_call.1} parent=24 // pred_check
            _
          $region49: #{tpu_custom_call.1} parent=24 // pred_check_branch
            %325 = sbr.rel target = $region51
          $region50: #{tpu_custom_call.1} parent=24 // pred_region
            _
          $region51: #{tpu_custom_call.1} parent=24 // pred_fallthru
            _
        $region25: #{tpu_custom_call.1} parent=20 // pred_fallthru
          _
        // Predicated region
        $region26: #{tpu_custom_call.1} parent=20 // pred_check
          _
        $region27: #{tpu_custom_call.1} parent=20 // pred_check_branch
          %252 = sbr.rel target = $region29
        $region28: #{tpu_custom_call.1} parent=20 // pred_region
          loop: start=0, step=1, limit=1
          $region30: #{tpu_custom_call.1} parent=28 // loop_pre_header
            _
          $region31: #{tpu_custom_call.1} parent=28 // loop_header
            %s255 = sphi 0, %s259
            %p256 = scmp.ge.s32.totalorder %s255, 1
            %s260 = sphi [#allocation2], [#allocation2]
            %s261 = sphi %s3, %s3
          $region32: #{tpu_custom_call.1} parent=28 // loop_header_branch
            %258 = sbr.rel (%p256) target = $region36
          $region33: #{tpu_custom_call.1} parent=28 // loop_body
            %v262 = vld [vmem:[%s260] sm:$0xff]
            %263 = vst [vmem:[%s261] sm:$0xff] %v262
            %v264 = vld [vmem:[%s260 + $0x8] sm:$0xff]
            %265 = vst [vmem:[%s261 + $0x8] sm:$0xff] %v264
            %v266 = vld [vmem:[%s260 + $0x10] sm:$0xff]
            %267 = vst [vmem:[%s261 + $0x10] sm:$0xff] %v266
            %v268 = vld [vmem:[%s260 + $0x18] sm:$0xff]
            %269 = vst [vmem:[%s261 + $0x18] sm:$0xff] %v268
            %v270 = vld [vmem:[%s260 + $0x20] sm:$0xff]
            %271 = vst [vmem:[%s261 + $0x20] sm:$0xff] %v270
            %v272 = vld [vmem:[%s260 + $0x28] sm:$0xff]
            %273 = vst [vmem:[%s261 + $0x28] sm:$0xff] %v272
            %v274 = vld [vmem:[%s260 + $0x30] sm:$0xff]
            %275 = vst [vmem:[%s261 + $0x30] sm:$0xff] %v274
            %v276 = vld [vmem:[%s260 + $0x38] sm:$0xff]
            %277 = vst [vmem:[%s261 + $0x38] sm:$0xff] %v276
            %v278 = vld [vmem:[%s260 + $0x40] sm:$0xff]
            %279 = vst [vmem:[%s261 + $0x40] sm:$0xff] %v278
            %v280 = vld [vmem:[%s260 + $0x48] sm:$0xff]
            %281 = vst [vmem:[%s261 + $0x48] sm:$0xff] %v280
            %v282 = vld [vmem:[%s260 + $0x50] sm:$0xff]
            %283 = vst [vmem:[%s261 + $0x50] sm:$0xff] %v282
            %v284 = vld [vmem:[%s260 + $0x58] sm:$0xff]
            %285 = vst [vmem:[%s261 + $0x58] sm:$0xff] %v284
            %v286 = vld [vmem:[%s260 + $0x60] sm:$0xff]
            %287 = vst [vmem:[%s261 + $0x60] sm:$0xff] %v286
          $region34: #{tpu_custom_call.1} parent=28 // loop_footer
            %s259 = sadd.s32 1, %s255
          $region35: #{tpu_custom_call.1} parent=28 // loop_footer_branch
            %254 = sbr.rel target = $region31
          $region36: #{tpu_custom_call.1} parent=28 // loop_exit
            _
        $region29: #{tpu_custom_call.1} parent=20 // pred_fallthru
          _
      $region21: #{tpu_custom_call.1} parent=16 // pred_fallthru
        _
      %326 = vnop
    $region17: #{tpu_custom_call.1} parent=1 // pred_fallthru
      _
    // Predicated region
    $region52: #{tpu_custom_call.1} parent=1 // pred_check
      _
    $region53: #{tpu_custom_call.1} parent=1 // pred_check_branch
      %328 = sbr.rel (0) target = $region55
    $region54: #{tpu_custom_call.1} parent=1 // pred_region
      _
    $region55: #{tpu_custom_call.1} parent=1 // pred_fallthru
      _

</llo_original>
